<compile_context>
chip_gen: v5e
topology: v5e:2x2
jax: 0.10.0
libtpu: 0.0.40
codegen_flags: <defaults>
</compile_context>

<pallas_src>
import jax
import jax.numpy as jnp
from jax.experimental import pallas as pl
from jax.experimental.pallas import tpu as pltpu


def _rnn_rollout_kernel(act_ref, rew_ref, h0_ref, w_in_ref, w_rec_ref,
                        b_rec_ref, w_diff_ref, policy_ref, h_out_ref,
                        h_scratch):
    t = pl.program_id(1)

    # First timestep of each batch tile: load initial hidden state into the
    # VMEM carry.
    @pl.when(t == 0)
    def _():
        h_scratch[...] = h0_ref[...]

    act = act_ref[0]                       # [NB, 1] int32
    rew = rew_ref[0]                       # [NB, 1] f32
    h = h_scratch[...]                     # [NB, U_pad] f32

    # one_hot(act, 2) @ W_in[:2] + rew * W_in[2] + b_rec
    #   == one vsel + fma + add, all on the VPU (no explicit one-hot matmul).
    in_contrib = (jnp.where(act == 0, w_in_ref[0:1, :], w_in_ref[1:2, :])
                  + rew * w_in_ref[2:3, :]
                  + b_rec_ref[...])                              # [NB, U_pad]

    # Recurrent matmul on the MXU (lane-dense: U_pad is a multiple of 128).
    rec_contrib = jnp.dot(h, w_rec_ref[...],
                          preferred_element_type=jnp.float32)    # [NB, U_pad]

    h_new = jnp.tanh(in_contrib + rec_contrib)                   # [NB, U_pad]
    h_scratch[...] = h_new
    # TODO(synk): optional with_noise path (h += N(0, noise_level)) could use
    # pltpu.prng_seed / pltpu.stateful_normal; omitted (default noise_level<=0).

    # Policy head.  For 2 classes, softmax(h @ W_out) is
    #   p1 = sigmoid(h . (W_out[:,1] - W_out[:,0])),  p0 = 1 - p1.
    # w_diff is precomputed in the wrapper; padded hidden columns are zero, so
    # the reduction is exact.  VPU mul + XLU lane-sum + EUP exp — MXU-free.
    d = jnp.sum(h_new * w_diff_ref[...], axis=-1, keepdims=True)  # [NB, 1]
    p1 = 1.0 / (1.0 + jnp.exp(-d))
    p0 = 1.0 - p1

    _, nb, out_pad = policy_ref.shape
    col = jax.lax.broadcasted_iota(jnp.int32, (nb, out_pad), 1)
    policy_ref[0] = jnp.where(col == 0, p0, jnp.where(col == 1, p1, 0.0))

    # Write the final hidden state back only on the last timestep.
    @pl.when(t == pl.num_programs(1) - 1)
    def _():
        h_out_ref[...] = h_new


def _round_up(x, m):
    return (x + m - 1) // m * m


def rnn_rollout(act_seq, rew_seq, h0, W_in, W_rec, b_rec, W_out):
    """Fused multi-step RNN rollout.

    act_seq: [T, N] int32, rew_seq: [T, N] f32, h0: [N, U] f32.
    Returns (policies [T, N, 2] f32, h_final [N, U] f32).
    """
    T, N = act_seq.shape
    U = h0.shape[1]
    U_pad = _round_up(U, 128)
    OUT_PAD = 128

    # Batch tiling: 128-row tiles when possible ("parallel" axis -> shards
    # across TensorCores); otherwise a single full-batch tile.
    NB = 128 if (N % 128 == 0) else N
    num_b = N // NB

    def pad2(x, rows, cols):
        x = x.astype(jnp.float32)
        return jnp.zeros((rows, cols), jnp.float32).at[
            :x.shape[0], :x.shape[1]].set(x)

    W_in_p = pad2(W_in, 3, U_pad)
    W_rec_p = pad2(W_rec, U_pad, U_pad)
    b_rec_p = pad2(b_rec.reshape(1, U), 1, U_pad)
    w_diff_p = pad2((W_out[:, 1] - W_out[:, 0]).reshape(1, U), 1, U_pad)
    h0_p = pad2(h0, N, U_pad)

    act3 = act_seq.reshape(T, N, 1).astype(jnp.int32)
    rew3 = rew_seq.reshape(T, N, 1).astype(jnp.float32)

    policies_p, h_final_p = pl.pallas_call(
        _rnn_rollout_kernel,
        out_shape=(
            jax.ShapeDtypeStruct((T, N, OUT_PAD), jnp.float32),
            jax.ShapeDtypeStruct((N, U_pad), jnp.float32),
        ),
        grid_spec=pltpu.PrefetchScalarGridSpec(
            num_scalar_prefetch=0,
            grid=(num_b, T),
            in_specs=[
                pl.BlockSpec((1, NB, 1), lambda b, t: (t, b, 0)),        # act
                pl.BlockSpec((1, NB, 1), lambda b, t: (t, b, 0)),        # rew
                pl.BlockSpec((NB, U_pad), lambda b, t: (b, 0)),          # h0
                pl.BlockSpec((3, U_pad), lambda b, t: (0, 0)),           # W_in
                pl.BlockSpec((U_pad, U_pad), lambda b, t: (0, 0)),       # W_rec
                pl.BlockSpec((1, U_pad), lambda b, t: (0, 0)),           # b_rec
                pl.BlockSpec((1, U_pad), lambda b, t: (0, 0)),           # w_diff
            ],
            out_specs=(
                pl.BlockSpec((1, NB, OUT_PAD), lambda b, t: (t, b, 0)),  # pol
                pl.BlockSpec((NB, U_pad), lambda b, t: (b, 0)),          # h_out
            ),
            scratch_shapes=[pltpu.VMEM((NB, U_pad), jnp.float32)],
        ),
        input_output_aliases={2: 1},   # h0 HBM buffer reused for h_final
        compiler_params=pltpu.CompilerParams(
            dimension_semantics=("parallel", "arbitrary")),
    )(act3, rew3, h0_p, W_in_p, W_rec_p, b_rec_p, w_diff_p)

    return policies_p[:, :, :2], h_final_p[:, :U]


def rnn_forward(prev_act, prev_rew, h, W_in, W_rec, b_rec, W_out):
    """Single-step forward matching RNN.forward: returns (policy, h_new)."""
    policies, h_new = rnn_rollout(prev_act[None, :], prev_rew[None, :], h,
                                  W_in, W_rec, b_rec, W_out)
    return policies[0], h_new


if __name__ == "__main__":
    num_units = 32
    n_parallel = 8
    num_steps = 8

    key = jax.random.PRNGKey(0)
    k1, k2, k3, k4, k5, k6 = jax.random.split(key, 6)

    # deterministic xavier-uniform-like init (matches reset_weights() shapes)
    def xavier(k, shape):
        fan_in, fan_out = shape
        lim = jnp.sqrt(6.0 / (fan_in + fan_out))
        return jax.random.uniform(k, shape, jnp.float32, -lim, lim)

    W_rec = xavier(k1, (num_units, num_units))
    W_in = xavier(k2, (3, num_units))
    W_out = xavier(k3, (num_units, 2))
    b_rec = jnp.zeros((num_units,), jnp.float32)

    act_seq = jax.random.randint(k4, (num_steps, n_parallel), 0, 2,
                                 dtype=jnp.int32)
    rew_seq = jax.random.uniform(k5, (num_steps, n_parallel),
                                 jnp.float32) - 0.5
    h0 = jax.random.normal(k6, (n_parallel, num_units), jnp.float32) * 0.1

    rollout = jax.jit(rnn_rollout)
    policies, h_final = rollout(act_seq, rew_seq, h0,
                                W_in, W_rec, b_rec, W_out)
    jax.block_until_ready((policies, h_final))

    # plain-JAX reference: scan of the per-step PyTorch forward semantics
    def ref_step(h, xs):
        act, rew = xs
        one_hot = jax.nn.one_hot(act, 2, dtype=jnp.float32)
        inp = jnp.concatenate([one_hot, rew[:, None]], axis=1)
        h_new = jnp.tanh(inp @ W_in + h @ W_rec + b_rec)
        policy = jax.nn.softmax(h_new @ W_out, axis=1)
        return h_new, policy

    ref_h_final, ref_policies = jax.lax.scan(ref_step, h0, (act_seq, rew_seq))

    assert policies.shape == (num_steps, n_parallel, 2)
    assert h_final.shape == (n_parallel, num_units)
    assert jnp.allclose(policies, ref_policies, atol=5e-5), "policy mismatch"
    assert jnp.allclose(h_final, ref_h_final, atol=5e-5), "hidden mismatch"

    # single-step API (RNN.forward), built on the same fused kernel (T=1)
    pol1, h1 = rnn_forward(act_seq[0], rew_seq[0], h0,
                           W_in, W_rec, b_rec, W_out)
    jax.block_until_ready((pol1, h1))
    ref_h1, ref_pol1 = ref_step(h0, (act_seq[0], rew_seq[0]))
    assert jnp.allclose(pol1, ref_pol1, atol=5e-5), "single-step policy mismatch"
    assert jnp.allclose(h1, ref_h1, atol=5e-5), "single-step hidden mismatch"

    print("KERNEL_OK")
</pallas_src>

<mosaic_0001>
module attributes {stable_mosaic.version = 11 : i64} {
  func.func @_rnn_rollout_kernel(%arg0: i32, %arg1: i32, %arg2: memref<1x8x1xi32, #tpu.memory_space<vmem>>, %arg3: memref<1x8x1xf32, #tpu.memory_space<vmem>>, %arg4: memref<8x128xf32, #tpu.memory_space<vmem>>, %arg5: memref<3x128xf32, #tpu.memory_space<vmem>>, %arg6: memref<128x128xf32, #tpu.memory_space<vmem>>, %arg7: memref<1x128xf32, #tpu.memory_space<vmem>>, %arg8: memref<1x128xf32, #tpu.memory_space<vmem>>, %arg9: memref<1x8x128xf32, #tpu.memory_space<vmem>>, %arg10: memref<8x128xf32, #tpu.memory_space<vmem>>, %arg11: memref<8x128xf32, #tpu.memory_space<vmem>>) attributes {dimension_semantics = [#tpu.dimension_semantics<parallel>, #tpu.dimension_semantics<arbitrary>], iteration_bounds = array<i64: 1, 8>, scalar_prefetch = 0 : i64, scratch_operands = 1 : i64, tpu.core_type = #tpu.core_type<tc>, window_params = [{transform_indices = @transform_0, window_bounds = array<i64: 1, 8, 1>}, {transform_indices = @transform_1, window_bounds = array<i64: 1, 8, 1>}, {transform_indices = @transform_2, window_bounds = array<i64: 8, 128>}, {pipeline_mode = #tpu.pipeline_mode<synchronous>, transform_indices = @transform_3, window_bounds = array<i64: 3, 128>}, {pipeline_mode = #tpu.pipeline_mode<synchronous>, transform_indices = @transform_4, window_bounds = array<i64: 128, 128>}, {pipeline_mode = #tpu.pipeline_mode<synchronous>, transform_indices = @transform_5, window_bounds = array<i64: 1, 128>}, {pipeline_mode = #tpu.pipeline_mode<synchronous>, transform_indices = @transform_6, window_bounds = array<i64: 1, 128>}, {transform_indices = @transform_7, window_bounds = array<i64: 1, 8, 128>}, {transform_indices = @transform_8, window_bounds = array<i64: 8, 128>}]} {
    %c0_i32 = arith.constant 0 : i32
    %0 = arith.cmpi eq, %arg1, %c0_i32 : i32
    %1 = arith.extui %0 : i1 to i32
    %c0_i32_0 = arith.constant 0 : i32
    %2 = arith.cmpi ne, %1, %c0_i32_0 : i32
    scf.if %2 {
      %c0_32 = arith.constant 0 : index
      %c0_33 = arith.constant 0 : index
      %64 = vector.load %arg4[%c0_32, %c0_33] : memref<8x128xf32, #tpu.memory_space<vmem>>, vector<8x128xf32>
      %c0_34 = arith.constant 0 : index
      %c0_35 = arith.constant 0 : index
      %65 = vector.load %arg11[%c0_34, %c0_35] : memref<8x128xf32, #tpu.memory_space<vmem>>, vector<8x128xf32>
      tpu.vector_store %arg11[%c0_34, %c0_35], %64 {strides = array<i32>} : memref<8x128xf32, #tpu.memory_space<vmem>>, vector<8x128xf32>,
    } else {
    }
    %c0 = arith.constant 0 : index
    %c0_1 = arith.constant 0 : index
    %c0_2 = arith.constant 0 : index
    %3 = vector.load %arg2[%c0, %c0_1, %c0_2] : memref<1x8x1xi32, #tpu.memory_space<vmem>>, vector<1x8x1xi32>
    %4 = vector.shape_cast %3 : vector<1x8x1xi32> to vector<8x1xi32>
    %c0_3 = arith.constant 0 : index
    %c0_4 = arith.constant 0 : index
    %c0_5 = arith.constant 0 : index
    %5 = vector.load %arg3[%c0_3, %c0_4, %c0_5] : memref<1x8x1xf32, #tpu.memory_space<vmem>>, vector<1x8x1xf32>
    %6 = vector.shape_cast %5 : vector<1x8x1xf32> to vector<8x1xf32>
    %c0_6 = arith.constant 0 : index
    %c0_7 = arith.constant 0 : index
    %7 = vector.load %arg11[%c0_6, %c0_7] : memref<8x128xf32, #tpu.memory_space<vmem>>, vector<8x128xf32>
    %c0_i32_8 = arith.constant 0 : i32
    %8 = vector.broadcast %c0_i32_8 : i32 to vector<8x1xi32>
    %9 = arith.cmpi eq, %4, %8 : vector<8x1xi32>
    %c0_9 = arith.constant 0 : index
    %c0_10 = arith.constant 0 : index
    %10 = vector.load %arg5[%c0_9, %c0_10] : memref<3x128xf32, #tpu.memory_space<vmem>>, vector<1x128xf32>
    %c1 = arith.constant 1 : index
    %c0_11 = arith.constant 0 : index
    %11 = vector.load %arg5[%c1, %c0_11] : memref<3x128xf32, #tpu.memory_space<vmem>>, vector<1x128xf32>
    %12 = vector.shape_cast %9 : vector<8x1xi1> to vector<8x1xi1>
    %13 = vector.broadcast %12 : vector<8x1xi1> to vector<8x128xi1>
    %14 = vector.shape_cast %10 : vector<1x128xf32> to vector<1x128xf32>
    %15 = vector.broadcast %14 : vector<1x128xf32> to vector<8x128xf32>
    %16 = vector.shape_cast %11 : vector<1x128xf32> to vector<1x128xf32>
    %17 = vector.broadcast %16 : vector<1x128xf32> to vector<8x128xf32>
    %18 = arith.select %13, %15, %17 : vector<8x128xi1>, vector<8x128xf32>
    %c2 = arith.constant 2 : index
    %c0_12 = arith.constant 0 : index
    %19 = vector.load %arg5[%c2, %c0_12] : memref<3x128xf32, #tpu.memory_space<vmem>>, vector<1x128xf32>
    %20 = vector.broadcast %6 : vector<8x1xf32> to vector<8x128xf32>
    %21 = vector.broadcast %19 : vector<1x128xf32> to vector<8x128xf32>
    %22 = arith.mulf %20, %21 : vector<8x128xf32>
    %23 = arith.addf %18, %22 : vector<8x128xf32>
    %c0_13 = arith.constant 0 : index
    %c0_14 = arith.constant 0 : index
    %24 = vector.load %arg7[%c0_13, %c0_14] : memref<1x128xf32, #tpu.memory_space<vmem>>, vector<1x128xf32>
    %25 = vector.broadcast %24 : vector<1x128xf32> to vector<8x128xf32>
    %26 = arith.addf %23, %25 : vector<8x128xf32>
    %c0_15 = arith.constant 0 : index
    %c0_16 = arith.constant 0 : index
    %27 = vector.load %arg6[%c0_15, %c0_16] : memref<128x128xf32, #tpu.memory_space<vmem>>, vector<128x128xf32>
    %cst = arith.constant dense<0.000000e+00> : vector<8x128xf32>
    %28 = tpu.matmul %7, %27, %cst {dimension_numbers = #tpu.dot_dimension_numbers<[1], [0], [0], [1], [0, 0, 1, 1], [], []>} : vector<8x128xf32>, vector<128x128xf32>, vector<8x128xf32> -> vector<8x128xf32>
    %29 = arith.addf %26, %28 : vector<8x128xf32>
    %30 = math.tanh %29 : vector<8x128xf32>
    %c0_17 = arith.constant 0 : index
    %c0_18 = arith.constant 0 : index
    %31 = vector.load %arg11[%c0_17, %c0_18] : memref<8x128xf32, #tpu.memory_space<vmem>>, vector<8x128xf32>
    tpu.vector_store %arg11[%c0_17, %c0_18], %30 {strides = array<i32>} : memref<8x128xf32, #tpu.memory_space<vmem>>, vector<8x128xf32>,
    %c0_19 = arith.constant 0 : index
    %c0_20 = arith.constant 0 : index
    %32 = vector.load %arg8[%c0_19, %c0_20] : memref<1x128xf32, #tpu.memory_space<vmem>>, vector<1x128xf32>
    %33 = vector.broadcast %32 : vector<1x128xf32> to vector<8x128xf32>
    %34 = arith.mulf %30, %33 : vector<8x128xf32>
    %cst_21 = arith.constant dense<0.000000e+00> : vector<8xf32>
    %35 = vector.multi_reduction <add>, %34, %cst_21 [1] : vector<8x128xf32> to vector<8xf32>
    %36 = vector.shape_cast %35 : vector<8xf32> to vector<8x1xf32>
    %cst_22 = arith.constant 0.000000e+00 : f32
    %37 = vector.broadcast %cst_22 : f32 to vector<8x1xf32>
    %38 = arith.subf %37, %36 : vector<8x1xf32>
    %39 = math.exp %38 : vector<8x1xf32>
    %cst_23 = arith.constant 1.000000e+00 : f32
    %40 = vector.broadcast %cst_23 : f32 to vector<8x1xf32>
    %41 = arith.addf %40, %39 : vector<8x1xf32>
    %cst_24 = arith.constant 1.000000e+00 : f32
    %42 = vector.broadcast %cst_24 : f32 to vector<8x1xf32>
    %43 = arith.divf %42, %41 : vector<8x1xf32>
    %cst_25 = arith.constant 1.000000e+00 : f32
    %44 = vector.broadcast %cst_25 : f32 to vector<8x1xf32>
    %45 = arith.subf %44, %43 : vector<8x1xf32>
    %46 = tpu.iota {dimensions = array<i32: 1>} : vector<8x128xi32>
    %c0_i32_26 = arith.constant 0 : i32
    %47 = vector.broadcast %c0_i32_26 : i32 to vector<8x128xi32>
    %48 = arith.cmpi eq, %46, %47 : vector<8x128xi32>
    %c1_i32 = arith.constant 1 : i32
    %49 = vector.broadcast %c1_i32 : i32 to vector<8x128xi32>
    %50 = arith.cmpi eq, %46, %49 : vector<8x128xi32>
    %cst_27 = arith.constant 0.000000e+00 : f32
    %51 = vector.shape_cast %43 : vector<8x1xf32> to vector<8x1xf32>
    %52 = vector.broadcast %51 : vector<8x1xf32> to vector<8x128xf32>
    %53 = vector.broadcast %cst_27 : f32 to vector<8x128xf32>
    %54 = arith.select %50, %52, %53 : vector<8x128xi1>, vector<8x128xf32>
    %55 = vector.shape_cast %45 : vector<8x1xf32> to vector<8x1xf32>
    %56 = vector.broadcast %55 : vector<8x1xf32> to vector<8x128xf32>
    %57 = arith.select %48, %56, %54 : vector<8x128xi1>, vector<8x128xf32>
    %c0_28 = arith.constant 0 : index
    %c0_29 = arith.constant 0 : index
    %c0_30 = arith.constant 0 : index
    %58 = vector.load %arg9[%c0_28, %c0_29, %c0_30] : memref<1x8x128xf32, #tpu.memory_space<vmem>>, vector<1x8x128xf32>
    %59 = vector.shape_cast %58 : vector<1x8x128xf32> to vector<8x128xf32>
    %60 = vector.shape_cast %57 : vector<8x128xf32> to vector<1x8x128xf32>
    tpu.vector_store %arg9[%c0_28, %c0_29, %c0_30], %60 {strides = array<i32>} : memref<1x8x128xf32, #tpu.memory_space<vmem>>, vector<1x8x128xf32>,
    %c7_i32 = arith.constant 7 : i32
    %61 = arith.cmpi eq, %arg1, %c7_i32 : i32
    %62 = arith.extui %61 : i1 to i32
    %c0_i32_31 = arith.constant 0 : i32
    %63 = arith.cmpi ne, %62, %c0_i32_31 : i32
    scf.if %63 {
      %c0_32 = arith.constant 0 : index
      %c0_33 = arith.constant 0 : index
      %64 = vector.load %arg10[%c0_32, %c0_33] : memref<8x128xf32, #tpu.memory_space<vmem>>, vector<8x128xf32>
      tpu.vector_store %arg10[%c0_32, %c0_33], %30 {strides = array<i32>} : memref<8x128xf32, #tpu.memory_space<vmem>>, vector<8x128xf32>,
    } else {
    }
    return
  }
  func.func @transform_0(%arg0: i32, %arg1: i32) -> (i32, i32, i32) {
    %c0_i32 = arith.constant 0 : i32
    %c0_i32_0 = arith.constant 0 : i32
    return %arg1, %arg0, %c0_i32 : i32, i32, i32
  }
  func.func @transform_1(%arg0: i32, %arg1: i32) -> (i32, i32, i32) {
    %c0_i32 = arith.constant 0 : i32
    %c0_i32_0 = arith.constant 0 : i32
    return %arg1, %arg0, %c0_i32 : i32, i32, i32
  }
  func.func @transform_2(%arg0: i32, %arg1: i32) -> (i32, i32) {
    %c0_i32 = arith.constant 0 : i32
    %c0_i32_0 = arith.constant 0 : i32
    return %arg0, %c0_i32 : i32, i32
  }
  func.func @transform_3(%arg0: i32, %arg1: i32) -> (i32, i32) {
    %c0_i32 = arith.constant 0 : i32
    %c0_i32_0 = arith.constant 0 : i32
    %c0_i32_1 = arith.constant 0 : i32
    return %c0_i32, %c0_i32_0 : i32, i32
  }
  func.func @transform_4(%arg0: i32, %arg1: i32) -> (i32, i32) {
    %c0_i32 = arith.constant 0 : i32
    %c0_i32_0 = arith.constant 0 : i32
    %c0_i32_1 = arith.constant 0 : i32
    return %c0_i32, %c0_i32_0 : i32, i32
  }
  func.func @transform_5(%arg0: i32, %arg1: i32) -> (i32, i32) {
    %c0_i32 = arith.constant 0 : i32
    %c0_i32_0 = arith.constant 0 : i32
    %c0_i32_1 = arith.constant 0 : i32
    return %c0_i32, %c0_i32_0 : i32, i32
  }
  func.func @transform_6(%arg0: i32, %arg1: i32) -> (i32, i32) {
    %c0_i32 = arith.constant 0 : i32
    %c0_i32_0 = arith.constant 0 : i32
    %c0_i32_1 = arith.constant 0 : i32
    return %c0_i32, %c0_i32_0 : i32, i32
  }
  func.func @transform_7(%arg0: i32, %arg1: i32) -> (i32, i32, i32) {
    %c0_i32 = arith.constant 0 : i32
    %c0_i32_0 = arith.constant 0 : i32
    return %arg1, %arg0, %c0_i32 : i32, i32, i32
  }
  func.func @transform_8(%arg0: i32, %arg1: i32) -> (i32, i32) {
    %c0_i32 = arith.constant 0 : i32
    %c0_i32_0 = arith.constant 0 : i32
    return %arg0, %c0_i32 : i32, i32
  }
}

</mosaic_0001>

<llo_original>
// kernel: rnn_rollout.1
$region0: #{rnn_rollout.1}
  #allocation0 [shape = 'u32[]', space=smem, size = 0x4, offset = 0x4, fixed_abs, tag = 'smem constant byte address 0x4 - core index']
  #allocation1 [shape = 'u32[72,128]{1,0:T(1,128)}', space=vmem, size = 0x9000, scoped, tag = 'internal scratch']
  #allocation2 [shape = 'f32[8,128]{1,0:T(8,128)}', space=vmem, size = 0x1000, scoped, tag = 'scratch operand']
  %s0 = inlined_call_operand.vmem [shape: s32[8,8,1], index: 0, kind: input, shape index: {}]
  %s1 = inlined_call_operand.vmem [shape: f32[8,8,1], index: 1, kind: input, shape index: {}]
  %s2 = inlined_call_operand.vmem [shape: f32[8,128], index: 2, kind: input, shape index: {}, may-alias: {2,8}]
  %s3 = inlined_call_operand.vmem [shape: f32[3,128], index: 3, kind: input, shape index: {}]
  %s4 = inlined_call_operand.vmem [shape: f32[128,128], index: 4, kind: input, shape index: {}]
  %s5 = inlined_call_operand.vmem [shape: f32[1,128], index: 5, kind: input, shape index: {}]
  %s6 = inlined_call_operand.vmem [shape: f32[1,128], index: 6, kind: input, shape index: {}]
  %s7 = inlined_call_operand.vmem [shape: f32[8,8,128], index: 7, kind: output, shape index: {0}]
  %s8 = inlined_call_operand.vmem [shape: f32[8,128], index: 8, kind: output, shape index: {1}, may-alias: {2,8}]
  %9 = xla_tuple %s7, %s8
  %s10 = sld [smem:[#allocation0]]
  $region77: #{rnn_rollout.1} parent=0
    _
  %s12 = ssub.s32 1, %s10
  %s13 = scalar_select 0, %s12, %s10
  loop: start=0, step=1, limit=10
  $region2: #{rnn_rollout.1} parent=0 // loop_pre_header
    _
  $region3: #{rnn_rollout.1} parent=0 // loop_header
    %s15 = sphi 0, %s19
    %p16 = scmp.ge.s32.totalorder %s15, 10
    %s22 = sphi 0, %s34
    %s23 = sphi 0, %s30
    %s24 = sphi 0, %s22
    %s25 = sphi 0, %s23
    %s26 = sphi 0, %s24
    %s27 = sphi 0, %s25
    %s39 = sphi 0, %s41
    %s42 = sphi 0, %s39
    %s43 = sphi 0, %s42
    %s59 = sphi 0, %s43
    %s67 = sphi 0, %s69
    %s70 = sphi 0, %s67
    %s71 = sphi 0, %s70
    %s87 = sphi 0, %s71
    %s93 = sphi 0, %s95
    %s96 = sphi 0, %s93
    %s97 = sphi 0, %s96
    %s113 = sphi 0, %s97
    %s117 = sphi 0, %s117
    %s119 = sphi 0, %s117
    %s120 = sphi 0, %s119
    %s134 = sphi 0, %s120
    %s138 = sphi 0, %s138
    %s140 = sphi 0, %s138
    %s141 = sphi 0, %s140
    %s155 = sphi 0, %s141
    %s159 = sphi 0, %s159
    %s161 = sphi 0, %s159
    %s162 = sphi 0, %s161
    %s176 = sphi 0, %s162
    %s180 = sphi 0, %s180
    %s182 = sphi 0, %s180
    %s183 = sphi 0, %s182
    %s197 = sphi 0, %s183
    %s205 = sphi 0, %s207
    %s208 = sphi 0, %s205
    %s209 = sphi 0, %s208
    %s225 = sphi 0, %s209
    %s231 = sphi 0, %s233
    %s234 = sphi 0, %s231
    %s235 = sphi 0, %s234
    %s251 = sphi 0, %s235
  $region4: #{rnn_rollout.1} parent=0 // loop_header_branch
    %18 = sbr.rel (%p16) target = $region8
  $region5: #{rnn_rollout.1} parent=0 // loop_body
    %s20 = ssub.s32 %s15, 1
    %s21 = ssub.s32 %s15, 2
    %s28 = sadd.s32 1, %s23
    %p29 = scmp.ge.s32.totalorder %s28, 8
    %s30 = scalar_select %p29, 0, %s28
    %s31 = sadd.s32 1, %s22
    %s32 = scalar_select %p29, %s31, %s22
    %p33 = scmp.ge.s32.totalorder %s32, 1
    %s34 = scalar_select %p33, 0, %s32
    %s35 = ssub.s32 %s23, %s30
    %s36 = ssub.s32 %s22, %s34
    %s37 = sor.u32 %s35, %s36
    %p38 = scmp.eq.s32.totalorder %s37, 0
    %s40 = sadd.s32 %s39, 1
    %s41 = scalar_select %p38, %s39, %s40
    %p44 = pneg %p38
    %p45 = scmp.eq.s32.totalorder %s15, 7
    %p46 = por %p44, %p45
    %p47 = scmp.ne.s32.totalorder %s39, %s42
    %p48 = scmp.eq.s32.totalorder %s15, 0
    %p49 = por %p47, %p48
    %p50 = scmp.ne.s32.totalorder %s39, %s42
    %p51 = scmp.eq.s32.totalorder %s20, 7
    %p52 = por %p50, %p51
    %p53 = scmp.ne.s32.totalorder %s42, %s43
    %p54 = scmp.eq.s32.totalorder %s20, 0
    %p55 = por %p53, %p54
    %p56 = scmp.ne.s32.totalorder %s42, %s43
    %p57 = scmp.eq.s32.totalorder %s21, 7
    %p58 = por %p56, %p57
    %p60 = scmp.ne.s32.totalorder %s43, %s59
    %p61 = scmp.eq.s32.totalorder %s21, 0
    %p62 = por %p60, %p61
    %s63 = ssub.s32 %s23, %s30
    %s64 = ssub.s32 %s22, %s34
    %s65 = sor.u32 %s63, %s64
    %p66 = scmp.eq.s32.totalorder %s65, 0
    %s68 = sadd.s32 %s67, 1
    %s69 = scalar_select %p66, %s67, %s68
    %p72 = pneg %p66
    %p73 = scmp.eq.s32.totalorder %s15, 7
    %p74 = por %p72, %p73
    %p75 = scmp.ne.s32.totalorder %s67, %s70
    %p76 = scmp.eq.s32.totalorder %s15, 0
    %p77 = por %p75, %p76
    %p78 = scmp.ne.s32.totalorder %s67, %s70
    %p79 = scmp.eq.s32.totalorder %s20, 7
    %p80 = por %p78, %p79
    %p81 = scmp.ne.s32.totalorder %s70, %s71
    %p82 = scmp.eq.s32.totalorder %s20, 0
    %p83 = por %p81, %p82
    %p84 = scmp.ne.s32.totalorder %s70, %s71
    %p85 = scmp.eq.s32.totalorder %s21, 7
    %p86 = por %p84, %p85
    %p88 = scmp.ne.s32.totalorder %s71, %s87
    %p89 = scmp.eq.s32.totalorder %s21, 0
    %p90 = por %p88, %p89
    %s91 = ssub.s32 %s22, %s34
    %p92 = scmp.eq.s32.totalorder %s91, 0
    %s94 = sadd.s32 %s93, 1
    %s95 = scalar_select %p92, %s93, %s94
    %p98 = pneg %p92
    %p99 = scmp.eq.s32.totalorder %s15, 7
    %p100 = por %p98, %p99
    %p101 = scmp.ne.s32.totalorder %s93, %s96
    %p102 = scmp.eq.s32.totalorder %s15, 0
    %p103 = por %p101, %p102
    %p104 = scmp.ne.s32.totalorder %s93, %s96
    %p105 = scmp.eq.s32.totalorder %s20, 7
    %p106 = por %p104, %p105
    %p107 = scmp.ne.s32.totalorder %s96, %s97
    %p108 = scmp.eq.s32.totalorder %s20, 0
    %p109 = por %p107, %p108
    %p110 = scmp.ne.s32.totalorder %s96, %s97
    %p111 = scmp.eq.s32.totalorder %s21, 7
    %p112 = por %p110, %p111
    %p114 = scmp.ne.s32.totalorder %s97, %s113
    %p115 = scmp.eq.s32.totalorder %s21, 0
    %p116 = por %p114, %p115
    %s118 = sadd.s32 %s117, 1
    %p121 = scmp.eq.s32.totalorder %s15, 7
    %p122 = scmp.ne.s32.totalorder %s117, %s119
    %p123 = scmp.eq.s32.totalorder %s15, 0
    %p124 = por %p122, %p123
    %p125 = scmp.ne.s32.totalorder %s117, %s119
    %p126 = scmp.eq.s32.totalorder %s20, 7
    %p127 = por %p125, %p126
    %p128 = scmp.ne.s32.totalorder %s119, %s120
    %p129 = scmp.eq.s32.totalorder %s20, 0
    %p130 = por %p128, %p129
    %p131 = scmp.ne.s32.totalorder %s119, %s120
    %p132 = scmp.eq.s32.totalorder %s21, 7
    %p133 = por %p131, %p132
    %p135 = scmp.ne.s32.totalorder %s120, %s134
    %p136 = scmp.eq.s32.totalorder %s21, 0
    %p137 = por %p135, %p136
    %s139 = sadd.s32 %s138, 1
    %p142 = scmp.eq.s32.totalorder %s15, 7
    %p143 = scmp.ne.s32.totalorder %s138, %s140
    %p144 = scmp.eq.s32.totalorder %s15, 0
    %p145 = por %p143, %p144
    %p146 = scmp.ne.s32.totalorder %s138, %s140
    %p147 = scmp.eq.s32.totalorder %s20, 7
    %p148 = por %p146, %p147
    %p149 = scmp.ne.s32.totalorder %s140, %s141
    %p150 = scmp.eq.s32.totalorder %s20, 0
    %p151 = por %p149, %p150
    %p152 = scmp.ne.s32.totalorder %s140, %s141
    %p153 = scmp.eq.s32.totalorder %s21, 7
    %p154 = por %p152, %p153
    %p156 = scmp.ne.s32.totalorder %s141, %s155
    %p157 = scmp.eq.s32.totalorder %s21, 0
    %p158 = por %p156, %p157
    %s160 = sadd.s32 %s159, 1
    %p163 = scmp.eq.s32.totalorder %s15, 7
    %p164 = scmp.ne.s32.totalorder %s159, %s161
    %p165 = scmp.eq.s32.totalorder %s15, 0
    %p166 = por %p164, %p165
    %p167 = scmp.ne.s32.totalorder %s159, %s161
    %p168 = scmp.eq.s32.totalorder %s20, 7
    %p169 = por %p167, %p168
    %p170 = scmp.ne.s32.totalorder %s161, %s162
    %p171 = scmp.eq.s32.totalorder %s20, 0
    %p172 = por %p170, %p171
    %p173 = scmp.ne.s32.totalorder %s161, %s162
    %p174 = scmp.eq.s32.totalorder %s21, 7
    %p175 = por %p173, %p174
    %p177 = scmp.ne.s32.totalorder %s162, %s176
    %p178 = scmp.eq.s32.totalorder %s21, 0
    %p179 = por %p177, %p178
    %s181 = sadd.s32 %s180, 1
    %p184 = scmp.eq.s32.totalorder %s15, 7
    %p185 = scmp.ne.s32.totalorder %s180, %s182
    %p186 = scmp.eq.s32.totalorder %s15, 0
    %p187 = por %p185, %p186
    %p188 = scmp.ne.s32.totalorder %s180, %s182
    %p189 = scmp.eq.s32.totalorder %s20, 7
    %p190 = por %p188, %p189
    %p191 = scmp.ne.s32.totalorder %s182, %s183
    %p192 = scmp.eq.s32.totalorder %s20, 0
    %p193 = por %p191, %p192
    %p194 = scmp.ne.s32.totalorder %s182, %s183
    %p195 = scmp.eq.s32.totalorder %s21, 7
    %p196 = por %p194, %p195
    %p198 = scmp.ne.s32.totalorder %s183, %s197
    %p199 = scmp.eq.s32.totalorder %s21, 0
    %p200 = por %p198, %p199
    %s201 = ssub.s32 %s23, %s30
    %s202 = ssub.s32 %s22, %s34
    %s203 = sor.u32 %s201, %s202
    %p204 = scmp.eq.s32.totalorder %s203, 0
    %s206 = sadd.s32 %s205, 1
    %s207 = scalar_select %p204, %s205, %s206
    %p210 = pneg %p204
    %p211 = scmp.eq.s32.totalorder %s15, 7
    %p212 = por %p210, %p211
    %p213 = scmp.ne.s32.totalorder %s205, %s208
    %p214 = scmp.eq.s32.totalorder %s15, 0
    %p215 = por %p213, %p214
    %p216 = scmp.ne.s32.totalorder %s205, %s208
    %p217 = scmp.eq.s32.totalorder %s20, 7
    %p218 = por %p216, %p217
    %p219 = scmp.ne.s32.totalorder %s208, %s209
    %p220 = scmp.eq.s32.totalorder %s20, 0
    %p221 = por %p219, %p220
    %p222 = scmp.ne.s32.totalorder %s208, %s209
    %p223 = scmp.eq.s32.totalorder %s21, 7
    %p224 = por %p222, %p223
    %p226 = scmp.ne.s32.totalorder %s209, %s225
    %p227 = scmp.eq.s32.totalorder %s21, 0
    %p228 = por %p226, %p227
    %s229 = ssub.s32 %s22, %s34
    %p230 = scmp.eq.s32.totalorder %s229, 0
    %s232 = sadd.s32 %s231, 1
    %s233 = scalar_select %p230, %s231, %s232
    %p236 = pneg %p230
    %p237 = scmp.eq.s32.totalorder %s15, 7
    %p238 = por %p236, %p237
    %p239 = scmp.ne.s32.totalorder %s231, %s234
    %p240 = scmp.eq.s32.totalorder %s15, 0
    %p241 = por %p239, %p240
    %p242 = scmp.ne.s32.totalorder %s231, %s234
    %p243 = scmp.eq.s32.totalorder %s20, 7
    %p244 = por %p242, %p243
    %p245 = scmp.ne.s32.totalorder %s234, %s235
    %p246 = scmp.eq.s32.totalorder %s20, 0
    %p247 = por %p245, %p246
    %p248 = scmp.ne.s32.totalorder %s234, %s235
    %p249 = scmp.eq.s32.totalorder %s21, 7
    %p250 = por %p248, %p249
    %p252 = scmp.ne.s32.totalorder %s235, %s251
    %p253 = scmp.eq.s32.totalorder %s21, 0
    %p254 = por %p252, %p253
    %p255 = scmp.le.s32.totalorder 1, %s15
    %p256 = scmp.lt.s32.totalorder %s15, 9
    %p257 = pnand %p255, %p256
    %p258 = pneg %p257
    // Predicated region
    $region9: #{rnn_rollout.1} parent=5 // pred_check
      _
    $region10: #{rnn_rollout.1} parent=5 // pred_check_branch
      %260 = sbr.rel (%p257) target = $region12
    $region11: #{rnn_rollout.1} parent=5 // pred_region
      %s261 = ssub.s32 %s15, 1
      // Predicated region
      $region13: #{rnn_rollout.1} parent=11 // pred_check
        %p262 = pneg %p109
      $region14: #{rnn_rollout.1} parent=11 // pred_check_branch
        %264 = sbr.rel (%p262) target = $region16
      $region15: #{rnn_rollout.1} parent=11 // pred_region
        %p265 = scmp.lt.s32.totalorder %s24, 0
        %s266 = scalar_select %p265, %s24, 0
        %s267 = smul.addr %s266, 8
        %s268 = scalar_lea.vmem %s2, %s267
      $region16: #{rnn_rollout.1} parent=11 // pred_fallthru
        _
      // Predicated region
      $region17: #{rnn_rollout.1} parent=11 // pred_check
        %p269 = pneg %p130
      $region18: #{rnn_rollout.1} parent=11 // pred_check_branch
        %271 = sbr.rel (%p269) target = $region20
      $region19: #{rnn_rollout.1} parent=11 // pred_region
        _
      $region20: #{rnn_rollout.1} parent=11 // pred_fallthru
        _
      // Predicated region
      $region21: #{rnn_rollout.1} parent=11 // pred_check
        %p272 = pneg %p151
      $region22: #{rnn_rollout.1} parent=11 // pred_check_branch
        %274 = sbr.rel (%p272) target = $region24
      $region23: #{rnn_rollout.1} parent=11 // pred_region
        _
      $region24: #{rnn_rollout.1} parent=11 // pred_fallthru
        _
      // Predicated region
      $region25: #{rnn_rollout.1} parent=11 // pred_check
        %p275 = pneg %p172
      $region26: #{rnn_rollout.1} parent=11 // pred_check_branch
        %277 = sbr.rel (%p275) target = $region28
      $region27: #{rnn_rollout.1} parent=11 // pred_region
        _
      $region28: #{rnn_rollout.1} parent=11 // pred_fallthru
        _
      // Predicated region
      $region29: #{rnn_rollout.1} parent=11 // pred_check
        %p278 = pneg %p193
      $region30: #{rnn_rollout.1} parent=11 // pred_check_branch
        %280 = sbr.rel (%p278) target = $region32
      $region31: #{rnn_rollout.1} parent=11 // pred_region
        _
      $region32: #{rnn_rollout.1} parent=11 // pred_fallthru
        _
    $region12: #{rnn_rollout.1} parent=5 // pred_fallthru
      _
    %p281 = scmp.lt.s32.totalorder %s15, 8
    // Predicated region
    $region33: #{rnn_rollout.1} parent=5 // pred_check
      %p282 = pneg %p281
    $region34: #{rnn_rollout.1} parent=5 // pred_check_branch
      %284 = sbr.rel (%p282) target = $region36
    $region35: #{rnn_rollout.1} parent=5 // pred_region
      // Predicated region
      $region37: #{rnn_rollout.1} parent=35 // pred_check
        %p285 = pneg %p49
      $region38: #{rnn_rollout.1} parent=35 // pred_check_branch
        %287 = sbr.rel (%p285) target = $region40
      $region39: #{rnn_rollout.1} parent=35 // pred_region
        %p288 = scmp.lt.s32.totalorder %s23, 7
        %s289 = scalar_select %p288, %s23, 7
        %p290 = scmp.lt.s32.totalorder %s22, 0
        %s291 = scalar_select %p290, %s22, 0
        %s292 = sadd.s32 %s291, %s289
        %s293 = smul.addr %s292, 8
        %s294 = scalar_lea.vmem %s0, %s293
      $region40: #{rnn_rollout.1} parent=35 // pred_fallthru
        _
      // Predicated region
      $region41: #{rnn_rollout.1} parent=35 // pred_check
        %p295 = pneg %p77
      $region42: #{rnn_rollout.1} parent=35 // pred_check_branch
        %297 = sbr.rel (%p295) target = $region44
      $region43: #{rnn_rollout.1} parent=35 // pred_region
        %p298 = scmp.lt.s32.totalorder %s23, 7
        %s299 = scalar_select %p298, %s23, 7
        %p300 = scmp.lt.s32.totalorder %s22, 0
        %s301 = scalar_select %p300, %s22, 0
        %s302 = sadd.s32 %s301, %s299
        %s303 = smul.addr %s302, 8
        %s304 = scalar_lea.vmem %s1, %s303
      $region44: #{rnn_rollout.1} parent=35 // pred_fallthru
        _
    $region36: #{rnn_rollout.1} parent=5 // pred_fallthru
      _
    %p305 = scmp.le.s32.totalorder 1, %s15
    %p306 = scmp.lt.s32.totalorder %s15, 9
    %p307 = pnand %p305, %p306
    %p308 = pneg %p307
    // Predicated region
    $region45: #{rnn_rollout.1} parent=5 // pred_check
      _
    $region46: #{rnn_rollout.1} parent=5 // pred_check_branch
      %310 = sbr.rel (%p307) target = $region48
    $region47: #{rnn_rollout.1} parent=5 // pred_region
      %s311 = ssub.s32 %s15, 1
      %p312 = scmp.lt.s32.totalorder %s25, 7
      %s313 = scalar_select %p312, %s25, 7
      %p314 = scmp.lt.s32.totalorder %s24, 0
      %s315 = scalar_select %p314, %s24, 0
      %s316 = sadd.s32 %s315, %s313
      %s317 = smul.addr %s316, 8
      %s318 = scalar_lea.vmem %s0, %s317
      %p319 = pneg %p55
      %p320 = pneg %p52
      %p321 = scmp.lt.s32.totalorder %s25, 7
      %s322 = scalar_select %p321, %s25, 7
      %p323 = scmp.lt.s32.totalorder %s24, 0
      %s324 = scalar_select %p323, %s24, 0
      %s325 = sadd.s32 %s324, %s322
      %s326 = smul.addr %s325, 8
      %s327 = scalar_lea.vmem %s1, %s326
      %p328 = pneg %p83
      %p329 = pneg %p80
      %p330 = scmp.lt.s32.totalorder %s24, 0
      %s331 = scalar_select %p330, %s24, 0
      %s332 = smul.addr %s331, 8
      %s333 = scalar_lea.vmem %s2, %s332
      %p334 = pneg %p109
      %p335 = pneg %p106
      %p336 = pneg %p130
      %p337 = pneg %p127
      %p338 = pneg %p151
      %p339 = pneg %p148
      %p340 = pneg %p172
      %p341 = pneg %p169
      %p342 = pneg %p193
      %p343 = pneg %p190
      %p344 = pneg %p221
      %p345 = pneg %p218
      %p346 = scmp.lt.s32.totalorder %s25, 7
      %s347 = scalar_select %p346, %s25, 7
      %p348 = scmp.lt.s32.totalorder %s24, 0
      %s349 = scalar_select %p348, %s24, 0
      %s350 = sadd.s32 %s349, %s347
      %s351 = smul.addr %s350, 8
      %s352 = scalar_lea.vmem %s7, %s351
      %p353 = pneg %p247
      %p354 = pneg %p244
      %p355 = scmp.lt.s32.totalorder %s24, 0
      %s356 = scalar_select %p355, %s24, 0
      %s357 = smul.addr %s356, 8
      %s358 = scalar_lea.vmem %s8, %s357
      %p359 = scmp.lt.s32.totalorder %s25, 7
      %s360 = scalar_select %p359, %s25, 7
      %p361 = scmp.lt.s32.totalorder %s24, 0
      %s362 = scalar_select %p361, %s24, 0
      %s363 = sadd.s32 %s362, %s360
      %s364 = smul.addr %s363, 8
      %s365 = scalar_lea.vmem %s0, %s364
      %p366 = scmp.lt.s32.totalorder %s25, 7
      %s367 = scalar_select %p366, %s25, 7
      %p368 = scmp.lt.s32.totalorder %s24, 0
      %s369 = scalar_select %p368, %s24, 0
      %s370 = sadd.s32 %s369, %s367
      %s371 = smul.addr %s370, 8
      %s372 = scalar_lea.vmem %s1, %s371
      %p373 = scmp.lt.s32.totalorder %s24, 0
      %s374 = scalar_select %p373, %s24, 0
      %s375 = smul.addr %s374, 8
      %s376 = scalar_lea.vmem %s2, %s375
      %p377 = scmp.lt.s32.totalorder %s25, 7
      %s378 = scalar_select %p377, %s25, 7
      %p379 = scmp.lt.s32.totalorder %s24, 0
      %s380 = scalar_select %p379, %s24, 0
      %s381 = sadd.s32 %s380, %s378
      %s382 = smul.addr %s381, 8
      %s383 = scalar_lea.vmem %s7, %s382
      %p384 = scmp.lt.s32.totalorder %s24, 0
      %s385 = scalar_select %p384, %s24, 0
      %s386 = smul.addr %s385, 8
      %s387 = scalar_lea.vmem %s8, %s386
      %p388 = scmp.eq.s32.totalorder %s25, 0
      // Predicated region
      $region49: #{rnn_rollout.1} parent=47 // pred_check
        %p389 = pneg %p388
      $region50: #{rnn_rollout.1} parent=47 // pred_check_branch
        %391 = sbr.rel (%p389) target = $region52
      $region51: #{rnn_rollout.1} parent=47 // pred_region
        %v392 = vld [vmem:[%s376] sm:$0xff]
        %393 = vst [vmem:[#allocation2] sm:$0xff] %v392
      $region52: #{rnn_rollout.1} parent=47 // pred_fallthru
        _
      %v394 = vld [vmem:[%s365] sm:$0xff]
      %v395 = vld [vmem:[%s372] sm:$0xff]
      %v396 = vld [vmem:[#allocation2] sm:$0xff]
      %vm397 = vcmp.eq.s32.totalorder %v394, 0
      %v398 = vld [vmem:[%s3] sm:$0x1]
      %v399 = vld [vmem:[%s3 + $0x1] sm:$0x1]
      %v400 = vsel %vm397, 1, 0
      %401 = vset.pattern.permute.xlu0 0
      %402 = vperm.xlu0 %401, %v400
      %v403 = vpop.permute.xlu0 %402
      %vm404 = vcmp.eq.s32.totalorder %v403, 1
      %v405 = vperm.slane %v398, 0
      %v406 = vperm.slane %v399, 0
      %v407 = vsel %vm404, %v405, %v406
      %v408 = vld [vmem:[%s3 + $0x2] sm:$0x1]
      %410 = vset.pattern.permute.xlu0 0
      %411 = vperm.xlu0 %410, %v395
      %v412 = vpop.permute.xlu0 %411
      %v414 = vperm.slane %v408, 0
      %v415 = vmul.f32 %v412, %v414
      %v416 = vadd.f32 %v407, %v415
      %v417 = vld [vmem:[%s5] sm:$0x1]
      %v419 = vperm.slane %v417, 0
      %v421 = vadd.f32 %v416, %v419
      %v422 = vld [vmem:[%s4] sm:$0xff]
      %v423 = vld [vmem:[%s4 + $0x8] sm:$0xff]
      %v424 = vld [vmem:[%s4 + $0x10] sm:$0xff]
      %v425 = vld [vmem:[%s4 + $0x18] sm:$0xff]
      %v426 = vld [vmem:[%s4 + $0x20] sm:$0xff]
      %v427 = vld [vmem:[%s4 + $0x28] sm:$0xff]
      %v428 = vld [vmem:[%s4 + $0x30] sm:$0xff]
      %v429 = vld [vmem:[%s4 + $0x38] sm:$0xff]
      %v430 = vld [vmem:[%s4 + $0x40] sm:$0xff]
      %v431 = vld [vmem:[%s4 + $0x48] sm:$0xff]
      %v432 = vld [vmem:[%s4 + $0x50] sm:$0xff]
      %v433 = vld [vmem:[%s4 + $0x58] sm:$0xff]
      %v434 = vld [vmem:[%s4 + $0x60] sm:$0xff]
      %v435 = vld [vmem:[%s4 + $0x68] sm:$0xff]
      %v436 = vld [vmem:[%s4 + $0x70] sm:$0xff]
      %v437 = vld [vmem:[%s4 + $0x78] sm:$0xff]
      %438 = vmatpush.msra.mxu0 %v437
      %439 = vmatpush.msra.mxu0 %v436
      %440 = vmatpush.msra.mxu0 %v435
      %441 = vmatpush.msra.mxu0 %v434
      %442 = vmatpush.msra.mxu0 %v433
      %443 = vmatpush.msra.mxu0 %v432
      %444 = vmatpush.msra.mxu0 %v431
      %445 = vmatpush.msra.mxu0 %v430
      %446 = vmatpush.msra.mxu0 %v429
      %447 = vmatpush.msra.mxu0 %v428
      %448 = vmatpush.msra.mxu0 %v427
      %449 = vmatpush.msra.mxu0 %v426
      %450 = vmatpush.msra.mxu0 %v425
      %451 = vmatpush.msra.mxu0 %v424
      %452 = vmatpush.msra.mxu0 %v423
      %453 = vmatpush.msra.mxu0 %v422
      %454 = vmatmul.f32.gmra.mxu0 %v396
      %v455 = vpop.f32.mrf.mxu0
      %v456 = vadd.f32 0.0, %v455
      %457 = vdwg.mxu0
      %v458 = vadd.f32 %v421, %v456
      %v459 = vtanh.pop %v458
      %460 = vst [vmem:[#allocation2] sm:$0xff] %v459
      %v461 = vld [vmem:[%s6] sm:$0x1]
      %v463 = vperm.slane %v461, 0
      %v465 = vmul.f32 %v459, %v463
      %466 = vadd.xlane.f32.xlu0 %v465
      %v467 = vpop.xlane.xlu0 %466
      %v468 = vsub.f32 0.0, %v467
      %v469 = vmul.f32 %v468, 1.442695
      %v470 = vpow.pop %v469
      %v471 = vadd.f32 %v470, 1.0
      %v472 = vrcp.pop %v471
      %v473 = vmul.f32 %v471, %v472
      %v474 = vsub.f32 1.0, %v473
      %v475 = vmul.f32 %v472, %v474
      %v476 = vadd.f32 %v472, %v475
      %vm477 = vweird.f32 %v471
      %vm478 = vweird.f32 %v472
      %vm479 = vmor %vm477, %vm478
      %v480 = vsel %vm479, %v472, %v476
      %v481 = vand.u32 2147483647, %v471
      %vm482 = vcmp.eq.f32.partialorder %v481, 8.507059e+37
      %v483 = vand.u32 %v471, 2147483648
      %v484 = vor.u32 1.1754944e-38, %v483
      %v485 = vsel %vm482, %v484, %v480
      %v486 = vmul.f32 1.0, %v485
      %v487 = vsub.f32 1.0, %v486
      %v488 = vlaneseq
      %v489 = vand.u32 %v488, 127
      %vm490 = vcmp.eq.s32.totalorder %v489, 0
      %vm491 = vcmp.eq.s32.totalorder %v489, 1
      %v492 = vsel %vm491, %v486, 0.0
      %v493 = vsel %vm490, %v487, %v492
      %494 = vst [vmem:[%s383] sm:$0xff] %v493
      %p495 = scmp.eq.s32.totalorder %s25, 7
      // Predicated region
      $region53: #{rnn_rollout.1} parent=47 // pred_check
        %p496 = pneg %p495
      $region54: #{rnn_rollout.1} parent=47 // pred_check_branch
        %498 = sbr.rel (%p496) target = $region56
      $region55: #{rnn_rollout.1} parent=47 // pred_region
        %499 = vst [vmem:[%s387] sm:$0xff] %v459
      $region56: #{rnn_rollout.1} parent=47 // pred_fallthru
        _
      %p500 = scmp.lt.s32.totalorder %s25, 7
      %s501 = scalar_select %p500, %s25, 7
      %p502 = scmp.lt.s32.totalorder %s24, 0
      %s503 = scalar_select %p502, %s24, 0
      %s504 = sadd.s32 %s503, %s501
      %s505 = smul.addr %s504, 8
      %s506 = scalar_lea.vmem %s7, %s505
      %p507 = scmp.lt.s32.totalorder %s24, 0
      %s508 = scalar_select %p507, %s24, 0
      %s509 = smul.addr %s508, 8
      %s510 = scalar_lea.vmem %s8, %s509
      // Predicated region
      $region57: #{rnn_rollout.1} parent=47 // pred_check
        %p511 = pneg %p218
      $region58: #{rnn_rollout.1} parent=47 // pred_check_branch
        %513 = sbr.rel (%p511) target = $region60
      $region59: #{rnn_rollout.1} parent=47 // pred_region
        _
      $region60: #{rnn_rollout.1} parent=47 // pred_fallthru
        _
      // Predicated region
      $region61: #{rnn_rollout.1} parent=47 // pred_check
        %p514 = pneg %p244
      $region62: #{rnn_rollout.1} parent=47 // pred_check_branch
        %516 = sbr.rel (%p514) target = $region64
      $region63: #{rnn_rollout.1} parent=47 // pred_region
        _
      $region64: #{rnn_rollout.1} parent=47 // pred_fallthru
        _
      // Predicated region
      $region65: #{rnn_rollout.1} parent=47 // pred_check
        %p517 = pneg %p244
      $region66: #{rnn_rollout.1} parent=47 // pred_check_branch
        %519 = sbr.rel (%p517) target = $region68
      $region67: #{rnn_rollout.1} parent=47 // pred_region
        %p520 = scmp.lt.s32.totalorder %s24, 0
        %s521 = scalar_select %p520, %s24, 0
        %s522 = smul.addr %s521, 8
        %s523 = scalar_lea.vmem %s8, %s522
      $region68: #{rnn_rollout.1} parent=47 // pred_fallthru
        _
    $region48: #{rnn_rollout.1} parent=5 // pred_fallthru
      _
    %p524 = scmp.le.s32.totalorder 2, %s15
    // Predicated region
    $region69: #{rnn_rollout.1} parent=5 // pred_check
      %p525 = pneg %p524
    $region70: #{rnn_rollout.1} parent=5 // pred_check_branch
      %527 = sbr.rel (%p525) target = $region72
    $region71: #{rnn_rollout.1} parent=5 // pred_region
      %s528 = ssub.s32 %s15, 2
      // Predicated region
      $region73: #{rnn_rollout.1} parent=71 // pred_check
        %p529 = pneg %p224
      $region74: #{rnn_rollout.1} parent=71 // pred_check_branch
        %531 = sbr.rel (%p529) target = $region76
      $region75: #{rnn_rollout.1} parent=71 // pred_region
        %p532 = scmp.lt.s32.totalorder %s27, 7
        %s533 = scalar_select %p532, %s27, 7
        %p534 = scmp.lt.s32.totalorder %s26, 0
        %s535 = scalar_select %p534, %s26, 0
        %s536 = sadd.s32 %s535, %s533
        %s537 = smul.addr %s536, 8
        %s538 = scalar_lea.vmem %s7, %s537
      $region76: #{rnn_rollout.1} parent=71 // pred_fallthru
        _
    $region72: #{rnn_rollout.1} parent=5 // pred_fallthru
      _
  $region6: #{rnn_rollout.1} parent=0 // loop_footer
    %s19 = sadd.s32 1, %s15
  $region7: #{rnn_rollout.1} parent=0 // loop_footer_branch
    %14 = sbr.rel target = $region3
  $region8: #{rnn_rollout.1} parent=0 // loop_exit
    _

</llo_original>
